<compile_context>
chip_gen: v5e
topology: v5e:2x2
jax: 0.10.0
libtpu: 0.0.40
codegen_flags: <defaults>
</compile_context>

<pallas_src>
import jax
import jax.numpy as jnp
from jax.experimental import pallas as pl
from jax.experimental.pallas import tpu as pltpu

HID1 = 128      # linear1 out
HID2 = 256      # linear2 out
A_PAD = 128     # action dim padded to one lane tile (lane-dense output)
NEG_INF = -1e30


def actor_kernel(x_ref, w_ref, b_ref, probs_ref):
    S = x_ref.shape[1]

    # Activations: elementwise math in f32, only the MXU operands are bf16.
    x = x_ref[...].astype(jnp.bfloat16)                                   # [B, S]

    # Static, tile-aligned views into the packed bf16 weight blob.
    w1 = w_ref[0:S, 0:HID1]                                               # [S, 128]
    w2 = w_ref[S:S + HID1, 0:HID2]                                        # [128, 256]
    w3 = w_ref[S + HID1:S + HID1 + HID2, 0:A_PAD]                         # [256, 128]

    # Packed f32 biases (row 2 carries -1e30 in the padded action lanes).
    b_all = b_ref[...]                                                    # [3, 256]
    b1 = b_all[0:1, 0:HID1]
    b2 = b_all[1:2, 0:HID2]
    b3 = b_all[2:3, 0:A_PAD]

    # linear1 + ReLU
    h1 = jnp.dot(x, w1[...], preferred_element_type=jnp.float32) + b1
    h1 = jnp.maximum(h1, 0.0).astype(jnp.bfloat16)

    # linear2 + ReLU
    h2 = jnp.dot(h1, w2[...], preferred_element_type=jnp.float32) + b2
    h2 = jnp.maximum(h2, 0.0).astype(jnp.bfloat16)

    # linear3 (padded action columns get logit = -1e30 from the bias)
    logits = jnp.dot(h2, w3[...], preferred_element_type=jnp.float32) + b3

    # numerically stable softmax over the full 128-lane tile
    m = jnp.max(logits, axis=-1, keepdims=True)
    e = jnp.exp(logits - m)                          # padded lanes underflow to 0
    denom = jnp.sum(e, axis=-1, keepdims=True)
    probs_ref[...] = e * pl.reciprocal(denom, approx=False)


def actor_forward(state, w_blob, b_blob, action_size):
    """state: [B, state_size] f32 -> Categorical probs: [B, action_size] f32."""
    B = state.shape[0]
    vmem = pl.BlockSpec(memory_space=pltpu.MemorySpace.VMEM)
    probs_padded = pl.pallas_call(
        actor_kernel,
        out_shape=jax.ShapeDtypeStruct((B, A_PAD), jnp.float32),
        in_specs=[vmem, vmem, vmem],
        out_specs=vmem,
    )(state, w_blob, b_blob)
    # Padded lanes are exactly 0; slice back to the real action dimension.
    return probs_padded[:, :action_size]


def init_params(key, state_size, action_size):
    """Deterministic init matching nn.Linear shapes (weights stored as (in, out))."""
    ks = jax.random.split(key, 6)

    def lin(kw, kb, fan_in, fan_out):
        bound = 1.0 / jnp.sqrt(jnp.float32(fan_in))
        w = jax.random.uniform(kw, (fan_in, fan_out), jnp.float32, -bound, bound)
        b = jax.random.uniform(kb, (1, fan_out), jnp.float32, -bound, bound)
        return w, b

    w1, b1 = lin(ks[0], ks[1], state_size, HID1)
    w2, b2 = lin(ks[2], ks[3], HID1, HID2)
    w3, b3 = lin(ks[4], ks[5], HID2, action_size)
    return (w1, b1, w2, b2, w3, b3)


def pack_params(params, state_size, action_size):
    """Pack 6 tensors into one bf16 weight blob + one f32 bias blob (done once)."""
    w1, b1, w2, b2, w3, b3 = params
    S = state_size

    w_blob = jnp.zeros((S + HID1 + HID2, HID2), jnp.float32)
    w_blob = w_blob.at[0:S, 0:HID1].set(w1)
    w_blob = w_blob.at[S:S + HID1, 0:HID2].set(w2)
    w_blob = w_blob.at[S + HID1:S + HID1 + HID2, 0:action_size].set(w3)
    w_blob = w_blob.astype(jnp.bfloat16)

    b_blob = jnp.zeros((3, HID2), jnp.float32)
    b_blob = b_blob.at[0, 0:HID1].set(b1.reshape(-1))
    b_blob = b_blob.at[1, 0:HID2].set(b2.reshape(-1))
    b_blob = b_blob.at[2, 0:action_size].set(b3.reshape(-1))
    b_blob = b_blob.at[2, action_size:A_PAD].set(NEG_INF)  # kill padded logits
    return w_blob, b_blob


def actor_reference(state, params):
    """Pure-JAX reference mirroring the kernel's bf16-operand / f32-accumulate math."""
    w1, b1, w2, b2, w3, b3 = params
    x = state.astype(jnp.bfloat16)
    h1 = jnp.dot(x, w1.astype(jnp.bfloat16), preferred_element_type=jnp.float32) + b1
    h1 = jnp.maximum(h1, 0.0).astype(jnp.bfloat16)
    h2 = jnp.dot(h1, w2.astype(jnp.bfloat16), preferred_element_type=jnp.float32) + b2
    h2 = jnp.maximum(h2, 0.0).astype(jnp.bfloat16)
    logits = jnp.dot(h2, w3.astype(jnp.bfloat16), preferred_element_type=jnp.float32) + b3
    return jax.nn.softmax(logits, axis=-1)


if __name__ == "__main__":
    STATE_SIZE = 32
    ACTION_SIZE = 8
    BATCH = 8

    key = jax.random.PRNGKey(0)
    k_params, k_state = jax.random.split(key)

    params = init_params(k_params, STATE_SIZE, ACTION_SIZE)
    w_blob, b_blob = pack_params(params, STATE_SIZE, ACTION_SIZE)
    state = jax.random.normal(k_state, (BATCH, STATE_SIZE), jnp.float32)

    probs = actor_forward(state, w_blob, b_blob, ACTION_SIZE)
    probs = jax.block_until_ready(probs)

    ref = actor_reference(state, params)
    assert probs.shape == (BATCH, ACTION_SIZE)
    assert jnp.allclose(jnp.sum(probs, axis=-1), 1.0, atol=1e-5)
    assert jnp.allclose(probs, ref, atol=1e-5, rtol=1e-5)

    # TODO(synk): torch.distributions.Categorical is a host-side distribution object;
    # the kernel returns its defining `probs` tensor.
    print("KERNEL_OK")
</pallas_src>

<mosaic_0001>
module attributes {stable_mosaic.version = 11 : i64} {
  func.func @actor_kernel(%arg0: memref<8x32xf32, #tpu.memory_space<vmem>>, %arg1: memref<416x256xbf16, #tpu.memory_space<vmem>>, %arg2: memref<3x256xf32, #tpu.memory_space<vmem>>, %arg3: memref<8x128xf32, #tpu.memory_space<vmem>>) attributes {dimension_semantics = [], scalar_prefetch = 0 : i64, scratch_operands = 0 : i64, tpu.core_type = #tpu.core_type<tc>} {
    %c0 = arith.constant 0 : index
    %c0_0 = arith.constant 0 : index
    %0 = vector.load %arg0[%c0, %c0_0] : memref<8x32xf32, #tpu.memory_space<vmem>>, vector<8x32xf32>
    %1 = arith.truncf %0 : vector<8x32xf32> to vector<8x32xbf16>
    %c0_1 = arith.constant 0 : index
    %c0_2 = arith.constant 0 : index
    %2 = vector.load %arg1[%c0_1, %c0_2] : memref<416x256xbf16, #tpu.memory_space<vmem>>, vector<32x128xbf16>
    %c32 = arith.constant 32 : index
    %c0_3 = arith.constant 0 : index
    %3 = vector.load %arg1[%c32, %c0_3] : memref<416x256xbf16, #tpu.memory_space<vmem>>, vector<128x256xbf16>
    %c160 = arith.constant 160 : index
    %c0_4 = arith.constant 0 : index
    %4 = vector.load %arg1[%c160, %c0_4] : memref<416x256xbf16, #tpu.memory_space<vmem>>, vector<256x128xbf16>
    %c0_5 = arith.constant 0 : index
    %c0_6 = arith.constant 0 : index
    %5 = vector.load %arg2[%c0_5, %c0_6] : memref<3x256xf32, #tpu.memory_space<vmem>>, vector<3x256xf32>
    %6 = vector.extract_strided_slice %5 {offsets = [0, 0], sizes = [1, 128], strides = [1, 1]} : vector<3x256xf32> to vector<1x128xf32>
    %7 = vector.extract_strided_slice %5 {offsets = [1, 0], sizes = [1, 256], strides = [1, 1]} : vector<3x256xf32> to vector<1x256xf32>
    %8 = vector.extract_strided_slice %5 {offsets = [2, 0], sizes = [1, 128], strides = [1, 1]} : vector<3x256xf32> to vector<1x128xf32>
    %cst = arith.constant dense<0.000000e+00> : vector<8x128xf32>
    %9 = tpu.matmul %1, %2, %cst {dimension_numbers = #tpu.dot_dimension_numbers<[1], [0], [0], [1], [0, 0, 1, 1], [], []>} : vector<8x32xbf16>, vector<32x128xbf16>, vector<8x128xf32> -> vector<8x128xf32>
    %10 = vector.broadcast %6 : vector<1x128xf32> to vector<8x128xf32>
    %11 = arith.addf %9, %10 : vector<8x128xf32>
    %cst_7 = arith.constant 0.000000e+00 : f32
    %12 = vector.broadcast %cst_7 : f32 to vector<8x128xf32>
    %13 = arith.maximumf %11, %12 : vector<8x128xf32>
    %14 = arith.truncf %13 : vector<8x128xf32> to vector<8x128xbf16>
    %cst_8 = arith.constant dense<0.000000e+00> : vector<8x256xf32>
    %15 = tpu.matmul %14, %3, %cst_8 {dimension_numbers = #tpu.dot_dimension_numbers<[1], [0], [0], [1], [0, 0, 1, 1], [], []>} : vector<8x128xbf16>, vector<128x256xbf16>, vector<8x256xf32> -> vector<8x256xf32>
    %16 = vector.broadcast %7 : vector<1x256xf32> to vector<8x256xf32>
    %17 = arith.addf %15, %16 : vector<8x256xf32>
    %cst_9 = arith.constant 0.000000e+00 : f32
    %18 = vector.broadcast %cst_9 : f32 to vector<8x256xf32>
    %19 = arith.maximumf %17, %18 : vector<8x256xf32>
    %20 = arith.truncf %19 : vector<8x256xf32> to vector<8x256xbf16>
    %cst_10 = arith.constant dense<0.000000e+00> : vector<8x128xf32>
    %21 = tpu.matmul %20, %4, %cst_10 {dimension_numbers = #tpu.dot_dimension_numbers<[1], [0], [0], [1], [0, 0, 1, 1], [], []>} : vector<8x256xbf16>, vector<256x128xbf16>, vector<8x128xf32> -> vector<8x128xf32>
    %22 = vector.broadcast %8 : vector<1x128xf32> to vector<8x128xf32>
    %23 = arith.addf %21, %22 : vector<8x128xf32>
    %cst_11 = arith.constant dense<0xFF800000> : vector<8xf32>
    %24 = vector.multi_reduction <maximumf>, %23, %cst_11 [1] : vector<8x128xf32> to vector<8xf32>
    %25 = vector.shape_cast %24 : vector<8xf32> to vector<8x1xf32>
    %26 = vector.broadcast %25 : vector<8x1xf32> to vector<8x128xf32>
    %27 = arith.subf %23, %26 : vector<8x128xf32>
    %28 = math.exp %27 : vector<8x128xf32>
    %cst_12 = arith.constant dense<0.000000e+00> : vector<8xf32>
    %29 = vector.multi_reduction <add>, %28, %cst_12 [1] : vector<8x128xf32> to vector<8xf32>
    %30 = vector.shape_cast %29 : vector<8xf32> to vector<8x1xf32>
    %31 = tpu.reciprocal %30 : vector<8x1xf32> -> vector<8x1xf32>
    %32 = vector.broadcast %31 : vector<8x1xf32> to vector<8x128xf32>
    %33 = arith.mulf %28, %32 : vector<8x128xf32>
    %c0_13 = arith.constant 0 : index
    %c0_14 = arith.constant 0 : index
    %34 = vector.load %arg3[%c0_13, %c0_14] : memref<8x128xf32, #tpu.memory_space<vmem>>, vector<8x128xf32>
    tpu.vector_store %arg3[%c0_13, %c0_14], %33 {strides = array<i32>} : memref<8x128xf32, #tpu.memory_space<vmem>>, vector<8x128xf32>,
    return
  }
}

</mosaic_0001>

<llo_original>
// kernel: tpu_custom_call.1
$region0: #{tpu_custom_call.1}
  #allocation0 [shape = 'u32[]', space=smem, size = 0x4, offset = 0x4, fixed_abs, tag = 'smem constant byte address 0x4 - core index']
  #allocation1 [shape = 'u32[72,128]{1,0:T(1,128)}', space=vmem, size = 0x9000, scoped, tag = 'internal scratch']
  %s0 = inlined_call_operand.hbm [shape: f32[8,32], index: 0, kind: input, shape index: {}]
  %s1 = inlined_call_operand.hbm [shape: bf16[416,256], index: 1, kind: input, shape index: {}]
  %s2 = inlined_call_operand.hbm [shape: f32[3,256], index: 2, kind: input, shape index: {}]
  %s3 = inlined_call_operand.hbm [shape: f32[8,128], index: 3, kind: output, shape index: {}]
  %s4 = sld [smem:[#allocation0]]
  $region34: #{tpu_custom_call.1} parent=0
    _
  %s6 = ssub.s32 1, %s4
  %s7 = scalar_select 0, %s6, %s4
  $region1: #{tpu_custom_call.1} parent=0
    #allocation2 [shape = 'u8[4096]{0}', space=vmem, size = 0x1000, scoped, tag = 'input window, operand 0, single buffered']
    #allocation3 [shape = 's32[1]{0}', space=sflag, size = 0x4, scoped, tag = 'scoped memory for tpu_custom_call.1']
    #allocation4 [shape = 's32[1]{0}', space=sflag, size = 0x4, scoped, tag = 'scoped memory for tpu_custom_call.1']
    #allocation5 [shape = 'u8[212992]{0}', space=vmem, size = 0x34000, scoped, tag = 'input window, operand 1, single buffered']
    #allocation6 [shape = 's32[1]{0}', space=sflag, size = 0x4, scoped, tag = 'scoped memory for tpu_custom_call.1']
    #allocation7 [shape = 'u8[4096]{0}', space=vmem, size = 0x1000, scoped, tag = 'input window, operand 2, single buffered']
    #allocation8 [shape = 'u8[4096]{0}', space=vmem, size = 0x1000, scoped, tag = 'output window, operand 0, single buffered']
    %8 = vsyncpa [#allocation3], 0
    %9 = vsyncpa [#allocation6], 0
    %10 = vsyncpa [#allocation4], 0
    // Predicated region
    $region2: #{tpu_custom_call.1} parent=1 // pred_check
      _
    $region3: #{tpu_custom_call.1} parent=1 // pred_check_branch
      %12 = sbr.rel (0) target = $region5
    $region4: #{tpu_custom_call.1} parent=1 // pred_region
      %14 = vsyncadd [#allocation3], 0
      %s16 = sshll.u32 %s0, 4
      %s17 = int_to_ptr.hbm [resolvable:$true] %s16
      %s18 = sshll.u32 [#allocation2], 4
      %s19 = int_to_ptr.vmem [resolvable:$true] %s18
      %21 = dma.hbm_to_vmem [thread:$0]  %s17, 128, %s19, [#allocation3]
    $region5: #{tpu_custom_call.1} parent=1 // pred_fallthru
      _
    // Predicated region
    $region6: #{tpu_custom_call.1} parent=1 // pred_check
      _
    $region7: #{tpu_custom_call.1} parent=1 // pred_check_branch
      %23 = sbr.rel (0) target = $region9
    $region8: #{tpu_custom_call.1} parent=1 // pred_region
      %25 = vsyncadd [#allocation6], 0
      %s26 = sshll.u32 %s1, 4
      %s27 = int_to_ptr.hbm [resolvable:$true] %s26
      %s28 = sshll.u32 [#allocation5], 4
      %s29 = int_to_ptr.vmem [resolvable:$true] %s28
      %34 = dma.hbm_to_vmem [thread:$0]  %s27, 6656, %s29, [#allocation6], 128, 128, 8
    $region9: #{tpu_custom_call.1} parent=1 // pred_fallthru
      _
    // Predicated region
    $region10: #{tpu_custom_call.1} parent=1 // pred_check
      _
    $region11: #{tpu_custom_call.1} parent=1 // pred_check_branch
      %36 = sbr.rel (0) target = $region13
    $region12: #{tpu_custom_call.1} parent=1 // pred_region
      %38 = vsyncadd [#allocation6], 0
      %s40 = sshll.u32 %s2, 4
      %s41 = int_to_ptr.hbm [resolvable:$true] %s40
      %s42 = sshll.u32 [#allocation7], 4
      %s43 = int_to_ptr.vmem [resolvable:$true] %s42
      %45 = dma.hbm_to_vmem [thread:$0]  %s41, 128, %s43, [#allocation6]
    $region13: #{tpu_custom_call.1} parent=1 // pred_fallthru
      _
    // Predicated region
    $region14: #{tpu_custom_call.1} parent=1 // pred_check
      _
    $region15: #{tpu_custom_call.1} parent=1 // pred_check_branch
      %47 = sbr.rel (0) target = $region17
    $region16: #{tpu_custom_call.1} parent=1 // pred_region
      %49 = dma.done [#allocation3], 128
    $region17: #{tpu_custom_call.1} parent=1 // pred_fallthru
      _
    // Predicated region
    $region18: #{tpu_custom_call.1} parent=1 // pred_check
      _
    $region19: #{tpu_custom_call.1} parent=1 // pred_check_branch
      %51 = sbr.rel (0) target = $region21
    $region20: #{tpu_custom_call.1} parent=1 // pred_region
      %53 = dma.done [#allocation6], 6656
    $region21: #{tpu_custom_call.1} parent=1 // pred_fallthru
      _
    // Predicated region
    $region22: #{tpu_custom_call.1} parent=1 // pred_check
      _
    $region23: #{tpu_custom_call.1} parent=1 // pred_check_branch
      %55 = sbr.rel (0) target = $region25
    $region24: #{tpu_custom_call.1} parent=1 // pred_region
      %57 = dma.done [#allocation6], 128
    $region25: #{tpu_custom_call.1} parent=1 // pred_fallthru
      _
    %v59 = vld [vmem:[#allocation2] sm:$0xff]
    %v60 = vpack.c.bf16 %v59, %v59
    %v61 = vld [vmem:[#allocation5] sm:$0xf]
    %v62 = vld [vmem:[#allocation5 + $0x8] sm:$0xf]
    %v63 = vld [vmem:[#allocation5 + $0x10] sm:$0xf]
    %v64 = vld [vmem:[#allocation5 + $0x18] sm:$0xf]
    %v65 = vld [vmem:[#allocation5 + $0x20] sm:$0xff]
    %v66 = vld [vmem:[#allocation5 + $0x28] sm:$0xff]
    %v67 = vld [vmem:[#allocation5 + $0x30] sm:$0xff]
    %v68 = vld [vmem:[#allocation5 + $0x38] sm:$0xff]
    %v69 = vld [vmem:[#allocation5 + $0x40] sm:$0xff]
    %v70 = vld [vmem:[#allocation5 + $0x48] sm:$0xff]
    %v71 = vld [vmem:[#allocation5 + $0x50] sm:$0xff]
    %v72 = vld [vmem:[#allocation5 + $0x58] sm:$0xff]
    %v73 = vld [vmem:[#allocation5 + $0x60] sm:$0xff]
    %v74 = vld [vmem:[#allocation5 + $0x68] sm:$0xff]
    %v75 = vld [vmem:[#allocation5 + $0x70] sm:$0xff]
    %v76 = vld [vmem:[#allocation5 + $0x78] sm:$0xff]
    %v77 = vld [vmem:[#allocation5 + $0x80] sm:$0xff]
    %v78 = vld [vmem:[#allocation5 + $0x88] sm:$0xff]
    %v79 = vld [vmem:[#allocation5 + $0x90] sm:$0xff]
    %v80 = vld [vmem:[#allocation5 + $0x98] sm:$0xff]
    %v81 = vld [vmem:[#allocation5 + $0xa0] sm:$0xf]
    %v82 = vld [vmem:[#allocation5 + $0xa8] sm:$0xf]
    %v83 = vld [vmem:[#allocation5 + $0xb0] sm:$0xf]
    %v84 = vld [vmem:[#allocation5 + $0xb8] sm:$0xf]
    %v85 = vld [vmem:[#allocation5 + $0xc0] sm:$0xf]
    %v86 = vld [vmem:[#allocation5 + $0xc8] sm:$0xf]
    %v87 = vld [vmem:[#allocation5 + $0xd0] sm:$0xf]
    %v88 = vld [vmem:[#allocation5 + $0xd8] sm:$0xf]
    %v89 = vld [vmem:[#allocation5 + $0xe0] sm:$0xf]
    %v90 = vld [vmem:[#allocation5 + $0xe8] sm:$0xf]
    %v91 = vld [vmem:[#allocation5 + $0xf0] sm:$0xf]
    %v92 = vld [vmem:[#allocation5 + $0xf8] sm:$0xf]
    %v93 = vld [vmem:[#allocation5 + $0x100] sm:$0xf]
    %v94 = vld [vmem:[#allocation5 + $0x108] sm:$0xf]
    %v95 = vld [vmem:[#allocation5 + $0x110] sm:$0xf]
    %v96 = vld [vmem:[#allocation5 + $0x118] sm:$0xf]
    %v97 = vld [vmem:[#allocation5 + $0x120] sm:$0xf]
    %v98 = vld [vmem:[#allocation5 + $0x128] sm:$0xf]
    %v99 = vld [vmem:[#allocation5 + $0x130] sm:$0xf]
    %v100 = vld [vmem:[#allocation5 + $0x138] sm:$0xf]
    %v101 = vld [vmem:[#allocation5 + $0x140] sm:$0xf]
    %v102 = vld [vmem:[#allocation5 + $0x148] sm:$0xf]
    %v103 = vld [vmem:[#allocation5 + $0x150] sm:$0xf]
    %v104 = vld [vmem:[#allocation5 + $0x158] sm:$0xf]
    %v105 = vld [vmem:[#allocation5 + $0x160] sm:$0xf]
    %v106 = vld [vmem:[#allocation5 + $0x168] sm:$0xf]
    %v107 = vld [vmem:[#allocation5 + $0x170] sm:$0xf]
    %v108 = vld [vmem:[#allocation5 + $0x178] sm:$0xf]
    %v109 = vld [vmem:[#allocation5 + $0x180] sm:$0xf]
    %v110 = vld [vmem:[#allocation5 + $0x188] sm:$0xf]
    %v111 = vld [vmem:[#allocation5 + $0x190] sm:$0xf]
    %v112 = vld [vmem:[#allocation5 + $0x198] sm:$0xf]
    %v113 = vld [vmem:[#allocation7] sm:$0x77]
    %v114 = vperm.slane %v113, 0
    %v119 = vunpack.c.l.b16 %v61
    %v120 = vunpack.c.l.b16 %v62
    %v121 = vunpack.c.l.b16 %v63
    %v122 = vunpack.c.l.b16 %v64
    %v123 = vpack.c.b16 %v120, %v119
    %v124 = vpack.c.b16 %v122, %v121
    %vm127 = vcmask 261120
    %v129 = vsel %vm127, %v60, 0
    %131 = vmatpush.bf16.msra.mxu0 0
    %132 = vmatpush.bf16.msra.mxu0 0
    %133 = vmatpush.bf16.msra.mxu0 0
    %134 = vmatpush.bf16.msra.mxu0 0
    %135 = vmatpush.bf16.msra.mxu0 0
    %136 = vmatpush.bf16.msra.mxu0 0
    %137 = vmatpush.bf16.msra.mxu0 %v124
    %138 = vmatpush.bf16.msra.mxu0 %v123
    %139 = vmatmul.bf16.gmra.mxu0 %v129
    %v140 = vpop.f32.mrf.mxu0
    %v141 = vadd.f32 %v114, %v140
    %v142 = vpop.f32.mrf.mxu0
    %143 = vdwg.mxu0
    %v144 = vmax.f32 %v141, 0.0
    %v145 = vpack.c.bf16 %v144, %v144
    %v147 = vperm.slane %v113, 1
    %v148 = vperm.slane %v113, 5
    %v151 = vperm.slane %v147, 1
    %v152 = vperm.slane %v148, 1
    %v169 = vunpack.c.l.b16 %v65
    %v170 = vunpack.c.h.b16 %v65
    %v171 = vunpack.c.l.b16 %v66
    %v172 = vunpack.c.h.b16 %v66
    %v173 = vunpack.c.l.b16 %v67
    %v174 = vunpack.c.h.b16 %v67
    %v175 = vunpack.c.l.b16 %v68
    %v176 = vunpack.c.h.b16 %v68
    %v177 = vunpack.c.l.b16 %v69
    %v178 = vunpack.c.h.b16 %v69
    %v179 = vunpack.c.l.b16 %v70
    %v180 = vunpack.c.h.b16 %v70
    %v181 = vunpack.c.l.b16 %v71
    %v182 = vunpack.c.h.b16 %v71
    %v183 = vunpack.c.l.b16 %v72
    %v184 = vunpack.c.h.b16 %v72
    %v185 = vunpack.c.l.b16 %v73
    %v186 = vunpack.c.h.b16 %v73
    %v187 = vunpack.c.l.b16 %v74
    %v188 = vunpack.c.h.b16 %v74
    %v189 = vunpack.c.l.b16 %v75
    %v190 = vunpack.c.h.b16 %v75
    %v191 = vunpack.c.l.b16 %v76
    %v192 = vunpack.c.h.b16 %v76
    %v193 = vunpack.c.l.b16 %v77
    %v194 = vunpack.c.h.b16 %v77
    %v195 = vunpack.c.l.b16 %v78
    %v196 = vunpack.c.h.b16 %v78
    %v197 = vunpack.c.l.b16 %v79
    %v198 = vunpack.c.h.b16 %v79
    %v199 = vunpack.c.l.b16 %v80
    %v200 = vunpack.c.h.b16 %v80
    %v201 = vpack.c.b16 %v171, %v169
    %v202 = vpack.c.b16 %v172, %v170
    %v203 = vpack.c.b16 %v175, %v173
    %v204 = vpack.c.b16 %v176, %v174
    %v205 = vpack.c.b16 %v179, %v177
    %v206 = vpack.c.b16 %v180, %v178
    %v207 = vpack.c.b16 %v183, %v181
    %v208 = vpack.c.b16 %v184, %v182
    %v209 = vpack.c.b16 %v187, %v185
    %v210 = vpack.c.b16 %v188, %v186
    %v211 = vpack.c.b16 %v191, %v189
    %v212 = vpack.c.b16 %v192, %v190
    %v213 = vpack.c.b16 %v195, %v193
    %v214 = vpack.c.b16 %v196, %v194
    %v215 = vpack.c.b16 %v199, %v197
    %v216 = vpack.c.b16 %v200, %v198
    %233 = vmatpush.bf16.msra.mxu0 %v215
    %234 = vmatpush.bf16.msra.mxu0 %v213
    %235 = vmatpush.bf16.msra.mxu0 %v211
    %236 = vmatpush.bf16.msra.mxu0 %v209
    %237 = vmatpush.bf16.msra.mxu0 %v207
    %238 = vmatpush.bf16.msra.mxu0 %v205
    %239 = vmatpush.bf16.msra.mxu0 %v203
    %240 = vmatpush.bf16.msra.mxu0 %v201
    %241 = vmatmul.bf16.gmra.mxu0 %v145
    %v242 = vpop.f32.mrf.mxu0
    %v243 = vadd.f32 %v151, %v242
    %v244 = vpop.f32.mrf.mxu0
    %245 = vdwg.mxu0
    %246 = vmatpush.bf16.msra.mxu0 %v216
    %247 = vmatpush.bf16.msra.mxu0 %v214
    %248 = vmatpush.bf16.msra.mxu0 %v212
    %249 = vmatpush.bf16.msra.mxu0 %v210
    %250 = vmatpush.bf16.msra.mxu0 %v208
    %251 = vmatpush.bf16.msra.mxu0 %v206
    %252 = vmatpush.bf16.msra.mxu0 %v204
    %253 = vmatpush.bf16.msra.mxu0 %v202
    %254 = vmatmul.bf16.gmra.mxu0 %v145
    %v255 = vpop.f32.mrf.mxu0
    %v256 = vadd.f32 %v152, %v255
    %v257 = vpop.f32.mrf.mxu0
    %258 = vdwg.mxu0
    %v259 = vmax.f32 %v243, 0.0
    %v260 = vmax.f32 %v256, 0.0
    %v261 = vpack.c.bf16 %v259, %v259
    %v262 = vpack.c.bf16 %v260, %v260
    %v263 = vperm.slane %v113, 2
    %v296 = vunpack.c.l.b16 %v81
    %v297 = vunpack.c.l.b16 %v82
    %v298 = vunpack.c.l.b16 %v83
    %v299 = vunpack.c.l.b16 %v84
    %v300 = vunpack.c.l.b16 %v85
    %v301 = vunpack.c.l.b16 %v86
    %v302 = vunpack.c.l.b16 %v87
    %v303 = vunpack.c.l.b16 %v88
    %v304 = vunpack.c.l.b16 %v89
    %v305 = vunpack.c.l.b16 %v90
    %v306 = vunpack.c.l.b16 %v91
    %v307 = vunpack.c.l.b16 %v92
    %v308 = vunpack.c.l.b16 %v93
    %v309 = vunpack.c.l.b16 %v94
    %v310 = vunpack.c.l.b16 %v95
    %v311 = vunpack.c.l.b16 %v96
    %v312 = vunpack.c.l.b16 %v97
    %v313 = vunpack.c.l.b16 %v98
    %v314 = vunpack.c.l.b16 %v99
    %v315 = vunpack.c.l.b16 %v100
    %v316 = vunpack.c.l.b16 %v101
    %v317 = vunpack.c.l.b16 %v102
    %v318 = vunpack.c.l.b16 %v103
    %v319 = vunpack.c.l.b16 %v104
    %v320 = vunpack.c.l.b16 %v105
    %v321 = vunpack.c.l.b16 %v106
    %v322 = vunpack.c.l.b16 %v107
    %v323 = vunpack.c.l.b16 %v108
    %v324 = vunpack.c.l.b16 %v109
    %v325 = vunpack.c.l.b16 %v110
    %v326 = vunpack.c.l.b16 %v111
    %v327 = vunpack.c.l.b16 %v112
    %v328 = vpack.c.b16 %v297, %v296
    %v329 = vpack.c.b16 %v299, %v298
    %v330 = vpack.c.b16 %v301, %v300
    %v331 = vpack.c.b16 %v303, %v302
    %v332 = vpack.c.b16 %v305, %v304
    %v333 = vpack.c.b16 %v307, %v306
    %v334 = vpack.c.b16 %v309, %v308
    %v335 = vpack.c.b16 %v311, %v310
    %v336 = vpack.c.b16 %v313, %v312
    %v337 = vpack.c.b16 %v315, %v314
    %v338 = vpack.c.b16 %v317, %v316
    %v339 = vpack.c.b16 %v319, %v318
    %v340 = vpack.c.b16 %v321, %v320
    %v341 = vpack.c.b16 %v323, %v322
    %v342 = vpack.c.b16 %v325, %v324
    %v343 = vpack.c.b16 %v327, %v326
    %360 = vmatpush.bf16.msra.mxu0 %v335
    %361 = vmatpush.bf16.msra.mxu0 %v334
    %362 = vmatpush.bf16.msra.mxu0 %v333
    %363 = vmatpush.bf16.msra.mxu0 %v332
    %364 = vmatpush.bf16.msra.mxu0 %v331
    %365 = vmatpush.bf16.msra.mxu0 %v330
    %366 = vmatpush.bf16.msra.mxu0 %v329
    %367 = vmatpush.bf16.msra.mxu0 %v328
    %368 = vmatmul.bf16.gmra.mxu0 %v261
    %v369 = vpop.f32.mrf.mxu0
    %v370 = vadd.f32 %v263, %v369
    %v371 = vpop.f32.mrf.mxu0
    %372 = vdwg.mxu0
    %373 = vmatpush.bf16.msra.mxu0 %v343
    %374 = vmatpush.bf16.msra.mxu0 %v342
    %375 = vmatpush.bf16.msra.mxu0 %v341
    %376 = vmatpush.bf16.msra.mxu0 %v340
    %377 = vmatpush.bf16.msra.mxu0 %v339
    %378 = vmatpush.bf16.msra.mxu0 %v338
    %379 = vmatpush.bf16.msra.mxu0 %v337
    %380 = vmatpush.bf16.msra.mxu0 %v336
    %381 = vmatmul.bf16.gmra.mxu0 %v262
    %v382 = vpop.f32.mrf.mxu0
    %v383 = vadd.f32 %v370, %v382
    %v384 = vpop.f32.mrf.mxu0
    %385 = vdwg.mxu0
    %386 = vmax.xlane.f32.xlu0 %v383
    %v387 = vpop.xlane.xlu0 %386
    %v388 = vsub.f32 %v383, %v387
    %v389 = vmul.f32 %v388, 1.442695
    %v390 = vpow.pop %v389
    %391 = vadd.xlane.f32.xlu0 %v390
    %v392 = vpop.xlane.xlu0 %391
    %v393 = vrcp.pop %v392
    %v394 = vmul.f32 %v392, %v393
    %v395 = vsub.f32 1.0, %v394
    %v396 = vmul.f32 %v393, %v395
    %v397 = vadd.f32 %v393, %v396
    %vm398 = vweird.f32 %v392
    %vm399 = vweird.f32 %v393
    %vm400 = vmor %vm398, %vm399
    %v401 = vsel %vm400, %v393, %v397
    %v402 = vand.u32 2147483647, %v392
    %vm403 = vcmp.eq.f32.partialorder %v402, 8.507059e+37
    %v404 = vand.u32 %v392, 2147483648
    %v405 = vor.u32 1.1754944e-38, %v404
    %v406 = vsel %vm403, %v405, %v401
    %v407 = vmul.f32 %v390, %v406
    %408 = vst [vmem:[#allocation8] sm:$0xff] %v407
    // Predicated region
    $region26: #{tpu_custom_call.1} parent=1 // pred_check
      _
    $region27: #{tpu_custom_call.1} parent=1 // pred_check_branch
      %410 = sbr.rel (0) target = $region29
    $region28: #{tpu_custom_call.1} parent=1 // pred_region
      %412 = vsyncadd [#allocation4], 0
      %s414 = sshll.u32 [#allocation8], 4
      %s415 = int_to_ptr.vmem [resolvable:$true] %s414
      %s416 = sshll.u32 %s3, 4
      %s417 = int_to_ptr.hbm [resolvable:$true] %s416
      %419 = dma.vmem_to_hbm [thread:$0]  %s415, 128, %s417, [#allocation4]
    $region29: #{tpu_custom_call.1} parent=1 // pred_fallthru
      _
    // Predicated region
    $region30: #{tpu_custom_call.1} parent=1 // pred_check
      _
    $region31: #{tpu_custom_call.1} parent=1 // pred_check_branch
      %421 = sbr.rel (0) target = $region33
    $region32: #{tpu_custom_call.1} parent=1 // pred_region
      %423 = dma.done [#allocation4], 128
    $region33: #{tpu_custom_call.1} parent=1 // pred_fallthru
      _
    %424 = vsyncpa [#allocation3], 1
    %425 = vsyncpa [#allocation6], 1
    %426 = vsyncpa [#allocation4], 1

</llo_original>
